<compile_context>
chip_gen: v7x
topology: tpu7x:2x2x1
jax: 0.10.0
libtpu: 0.0.40
codegen_flags: <defaults>
</compile_context>

<pallas_src>
import functools
import math

import numpy as np
import jax
import jax.numpy as jnp
from jax.experimental import pallas as pl
from jax.experimental.pallas import tpu as pltpu


# ----------------------------- module logic (glue) -----------------------------

def _pick_groups(in_chs, out_chs):
    def _divisors(n):
        divs = []
        i = 1
        while i * i <= n:
            if n % i == 0:
                divs.append(i)
                if i != n // i:
                    divs.append(n // i)
            i += 1
        return sorted(divs)

    best_g1, best_g2, best_cost = 1, in_chs, float("inf")
    for d in _divisors(in_chs):
        g1, g2 = d, in_chs // d
        cost = in_chs * in_chs / g1 + in_chs * out_chs / g2
        if cost < best_cost:
            best_cost, best_g1, best_g2 = cost, g1, g2
    return best_g1, best_g2


def _fused_weight_np(w1, w2, g1, g2):
    """Fuse conv1 (groups=g1), channel rearrange, conv2 (groups=g2) -> (Cin, Cout), host-side.

    Pure numpy so it is constant-folded: only the Pallas call touches the device.
    (Weights must be concrete arrays, i.e. call this outside jit.)
    """
    w1 = np.asarray(w1, dtype=np.float32)          # (Cin,  Cin//g1)
    w2 = np.asarray(w2, dtype=np.float32)          # (Cout, Cin//g2)
    Cin, Cout = w1.shape[0], w2.shape[0]

    # conv1 as dense (Cin_in, Cin_out), block-diagonal over g1 groups
    in1 = out1 = Cin // g1
    w1d = np.zeros((Cin, Cin), np.float32)
    for g in range(g1):
        w1d[g * in1:(g + 1) * in1, g * out1:(g + 1) * out1] = w1[g * out1:(g + 1) * out1, :].T

    # conv2 as dense (Cin_in, Cout), block-diagonal over g2 groups (acts on rearranged channels)
    in2, out2 = Cin // g2, Cout // g2
    w2d = np.zeros((Cin, Cout), np.float32)
    for g in range(g2):
        w2d[g * in2:(g + 1) * in2, g * out2:(g + 1) * out2] = w2[g * out2:(g + 1) * out2, :].T

    # fold einops 'b (g1 g2) ... -> b (g2 g1) ...' into the rows of W2
    perm = np.arange(Cin).reshape(g1, g2).T.reshape(-1)
    inv_perm = np.argsort(perm)
    w2_fold = w2d[inv_perm, :]                      # (Cin, Cout)
    return w1d @ w2_fold                            # (Cin, Cout)


# --------------------------------- Pallas kernel --------------------------------

def _fused_pointwise_kernel(x_ref, wt_ref, o_ref, *, compute_dtype):
    # x_ref:  (Cin,  TS)  spatial tile of one batch element (channels in sublanes, spatial in lanes)
    # wt_ref: (Cout, Cin) fused weight, transposed (weight-on-left)
    # o_ref:  (Cout, TS)  lane-dense output tile
    x = x_ref[...]
    w = wt_ref[...]
    if compute_dtype is not None:
        # In-kernel VPU cast: hidden under the DMA, never a separate HBM pass.
        x = x.astype(compute_dtype)
        w = w.astype(compute_dtype)
    o_ref[...] = jnp.dot(w, x, preferred_element_type=jnp.float32).astype(o_ref.dtype)


def factorized_conv_nd(x, w1, w2, g1, g2, *, compute_dtype=None, out_dtype=None, ts=None):
    """x: (B, Cin, *spatial) NC... layout (dim 1/2/3).  Returns (B, Cout, *spatial)."""
    B, Cin = x.shape[0], x.shape[1]
    spatial = x.shape[2:]
    S = int(np.prod(spatial))
    Cout = w2.shape[0]
    out_dtype = jnp.dtype(out_dtype) if out_dtype is not None else x.dtype

    # Single fused channel-mix weight (host-side numpy), weight-on-left orientation.
    wt = jnp.asarray(_fused_weight_np(w1, w2, g1, g2).T)      # (Cout, Cin)

    # --- spatial tile sizing: HBM-bound op, so make the tile as big as VMEM allows ---
    in_item = jnp.dtype(x.dtype).itemsize
    out_item = jnp.dtype(out_dtype).itemsize
    bytes_per_lane = 2 * (Cin * in_item + Cout * out_item)    # double-buffered in + out tiles
    VMEM_BUDGET = 24 << 20                                    # safe across v5e/v6e/v7x scoped limits
    ts_cap = int(max(128, min(16384, (VMEM_BUDGET // bytes_per_lane) // 128 * 128)))

    pad_to = None
    if ts is None:
        if S % 128 == 0:
            ts = min(ts_cap, S)
            if B == 1 and S >= 256:
                # v7x megacore: keep >=2 spatial grid steps so both TensorCores get work.
                ts = min(ts, pl.cdiv(pl.cdiv(S, 2), 128) * 128)
        elif S <= ts_cap:
            ts = S      # single full-extent block: no pad, no output slice
        else:
            # Rare: large AND 128-misaligned spatial extent -> minimal pad (<=127 columns).
            pad_to = pl.cdiv(S, 128) * 128
            ts = min(ts_cap, pad_to)

    x_flat = x.reshape(B, Cin, S)
    S_run = S
    if pad_to is not None:
        x_flat = jnp.pad(x_flat, ((0, 0), (0, 0), (0, pad_to - S)))
        S_run = pad_to

    grid = (B, pl.cdiv(S_run, ts))

    out = pl.pallas_call(
        functools.partial(_fused_pointwise_kernel, compute_dtype=compute_dtype),
        out_shape=jax.ShapeDtypeStruct((B, Cout, S_run), out_dtype),
        grid_spec=pltpu.PrefetchScalarGridSpec(
            num_scalar_prefetch=0,
            grid=grid,
            in_specs=[
                # per-batch spatial tile of x, NCHW consumed directly
                pl.BlockSpec((None, Cin, ts), lambda b, s: (b, 0, s)),
                # grid-invariant fused weight (tiny: Cout*Cin) -> no re-DMA across the grid
                pl.BlockSpec((Cout, Cin), lambda b, s: (0, 0)),
            ],
            out_specs=pl.BlockSpec((None, Cout, ts), lambda b, s: (b, 0, s)),
        ),
        compiler_params=pltpu.CompilerParams(
            dimension_semantics=("parallel", "parallel"),
            vmem_limit_bytes=32 << 20,      # raise above v5e's 16 MiB default; well under v7x physical
        ),
    )(x_flat, wt)

    if S_run != S:
        out = out[:, :, :S]
    return out.reshape((B, Cout) + spatial)


# ------------------------- pure-JAX reference (torch semantics) -----------------

def _ref_forward(x_nchw, w1, w2, g1, g2):
    B, Cin = x_nchw.shape[0], x_nchw.shape[1]
    spatial = x_nchw.shape[2:]
    S = int(np.prod(spatial))
    Cout = w2.shape[0]
    x = x_nchw.reshape(B, Cin, S)

    # conv1: in=out=Cin, groups=g1, kernel 1
    cpg1 = Cin // g1
    y = []
    for g in range(g1):
        xg = x[:, g * cpg1:(g + 1) * cpg1]
        wg = w1[g * cpg1:(g + 1) * cpg1]
        y.append(jnp.einsum("oi,bis->bos", wg, xg))
    y = jnp.concatenate(y, axis=1)

    # einops.rearrange 'b (g1 g2) s -> b (g2 g1) s'
    y = y.reshape(B, g1, g2, S).transpose(0, 2, 1, 3).reshape(B, Cin, S)

    # conv2: in=Cin, out=Cout, groups=g2, kernel 1
    cin2, cout2 = Cin // g2, Cout // g2
    z = []
    for g in range(g2):
        xg = y[:, g * cin2:(g + 1) * cin2]
        wg = w2[g * cout2:(g + 1) * cout2]
        z.append(jnp.einsum("oi,bis->bos", wg, xg))
    z = jnp.concatenate(z, axis=1)
    return z.reshape((B, Cout) + spatial)


# -------------------------------------- main -------------------------------------

if __name__ == "__main__":
    B, Cin, Cout, H, W = 2, 16, 32, 16, 16
    g1, g2 = _pick_groups(Cin, Cout)   # for (16, 32): g1=2, g2=8

    key = jax.random.PRNGKey(0)
    k1, k2, k3 = jax.random.split(key, 3)
    x = jax.random.normal(k1, (B, Cin, H, W), dtype=jnp.float32)
    # grouped Conv2d weights with 1x1 kernel squeezed:
    #   conv1.weight: (Cin, Cin//g1, 1, 1) -> (Cin, Cin//g1)
    #   conv2.weight: (Cout, Cin//g2, 1, 1) -> (Cout, Cin//g2)
    w1 = jax.random.normal(k2, (Cin, Cin // g1), dtype=jnp.float32) / math.sqrt(Cin // g1)
    w2 = jax.random.normal(k3, (Cout, Cin // g2), dtype=jnp.float32) / math.sqrt(Cin // g2)

    ref = _ref_forward(x, w1, w2, g1, g2)

    # f32 path (strict correctness)
    out = jax.block_until_ready(factorized_conv_nd(x, w1, w2, g1, g2))
    assert out.shape == (B, Cout, H, W)
    np.testing.assert_allclose(np.asarray(out), np.asarray(ref), rtol=1e-5, atol=1e-5)

    # bf16 MXU-input path: cast inside the kernel, f32 accumulation (tighter tolerance per review)
    out_bf16 = jax.block_until_ready(
        factorized_conv_nd(x, w1, w2, g1, g2, compute_dtype=jnp.bfloat16))
    np.testing.assert_allclose(np.asarray(out_bf16), np.asarray(ref), rtol=2e-2, atol=3e-2)

    # bf16 output path (cuts store HBM traffic ~33%); f32 accumulate, cast on final store
    out_bf16o = jax.block_until_ready(
        factorized_conv_nd(x, w1, w2, g1, g2, out_dtype=jnp.bfloat16))
    assert out_bf16o.dtype == jnp.bfloat16
    np.testing.assert_allclose(np.asarray(out_bf16o, dtype=np.float32), np.asarray(ref),
                               rtol=2e-2, atol=3e-2)

    # non-128-multiple spatial extent exercises the full-extent single-block path (no pad/slice)
    x2 = jax.random.normal(k1, (B, Cin, 10, 10), dtype=jnp.float32)
    out2 = jax.block_until_ready(factorized_conv_nd(x2, w1, w2, g1, g2))
    np.testing.assert_allclose(np.asarray(out2), np.asarray(_ref_forward(x2, w1, w2, g1, g2)),
                               rtol=1e-5, atol=1e-5)

    print("KERNEL_OK")
</pallas_src>

<mosaic_0001>
module attributes {stable_mosaic.version = 11 : i64} {
  func.func @_fused_pointwise_kernel(%arg0: i32, %arg1: i32, %arg2: memref<1x16x256xf32, #tpu.memory_space<vmem>>, %arg3: memref<32x16xf32, #tpu.memory_space<vmem>>, %arg4: memref<1x32x256xf32, #tpu.memory_space<vmem>>) attributes {dimension_semantics = [#tpu.dimension_semantics<parallel>, #tpu.dimension_semantics<parallel>], iteration_bounds = array<i64: 2, 1>, scalar_prefetch = 0 : i64, scratch_operands = 0 : i64, tpu.core_type = #tpu.core_type<tc>, window_params = [{transform_indices = @transform_0, window_bounds = array<i64: 1, 16, 256>}, {pipeline_mode = #tpu.pipeline_mode<synchronous>, transform_indices = @transform_1, window_bounds = array<i64: 32, 16>}, {transform_indices = @transform_2, window_bounds = array<i64: 1, 32, 256>}]} {
    %c0 = arith.constant 0 : index
    %c0_0 = arith.constant 0 : index
    %c0_1 = arith.constant 0 : index
    %0 = vector.load %arg2[%c0, %c0_0, %c0_1] : memref<1x16x256xf32, #tpu.memory_space<vmem>>, vector<1x16x256xf32>
    %1 = vector.shape_cast %0 : vector<1x16x256xf32> to vector<16x256xf32>
    %c0_2 = arith.constant 0 : index
    %c0_3 = arith.constant 0 : index
    %2 = vector.load %arg3[%c0_2, %c0_3] : memref<32x16xf32, #tpu.memory_space<vmem>>, vector<32x16xf32>
    %cst = arith.constant dense<0.000000e+00> : vector<32x256xf32>
    %3 = tpu.matmul %2, %1, %cst {dimension_numbers = #tpu.dot_dimension_numbers<[1], [0], [0], [1], [0, 0, 1, 1], [], []>} : vector<32x16xf32>, vector<16x256xf32>, vector<32x256xf32> -> vector<32x256xf32>
    %c0_4 = arith.constant 0 : index
    %c0_5 = arith.constant 0 : index
    %c0_6 = arith.constant 0 : index
    %4 = vector.load %arg4[%c0_4, %c0_5, %c0_6] : memref<1x32x256xf32, #tpu.memory_space<vmem>>, vector<1x32x256xf32>
    %5 = vector.shape_cast %4 : vector<1x32x256xf32> to vector<32x256xf32>
    %6 = vector.shape_cast %3 : vector<32x256xf32> to vector<1x32x256xf32>
    tpu.vector_store %arg4[%c0_4, %c0_5, %c0_6], %6 {strides = array<i32>} : memref<1x32x256xf32, #tpu.memory_space<vmem>>, vector<1x32x256xf32>,
    return
  }
  func.func @transform_0(%arg0: i32, %arg1: i32) -> (i32, i32, i32) {
    %c0_i32 = arith.constant 0 : i32
    %c0_i32_0 = arith.constant 0 : i32
    return %arg0, %c0_i32, %arg1 : i32, i32, i32
  }
  func.func @transform_1(%arg0: i32, %arg1: i32) -> (i32, i32) {
    %c0_i32 = arith.constant 0 : i32
    %c0_i32_0 = arith.constant 0 : i32
    %c0_i32_1 = arith.constant 0 : i32
    return %c0_i32, %c0_i32_0 : i32, i32
  }
  func.func @transform_2(%arg0: i32, %arg1: i32) -> (i32, i32, i32) {
    %c0_i32 = arith.constant 0 : i32
    %c0_i32_0 = arith.constant 0 : i32
    return %arg0, %c0_i32, %arg1 : i32, i32, i32
  }
}

</mosaic_0001>

<llo_original>
// kernel: tpu_custom_call.1
$region0: #{tpu_custom_call.1}
  #allocation0 [shape = 'u32[]', space=smem, size = 0x4, offset = 0x4, fixed_abs, tag = 'smem constant byte address 0x4 - core index']
  #allocation1 [shape = 'u32[144,128]{1,0:T(1,128)}', space=vmem, size = 0x12000, scoped, tag = 'internal scratch']
  %s0 = inlined_call_operand.hbm [shape: f32[2,16,256], index: 0, kind: input, shape index: {}]
  %s1 = inlined_call_operand.vmem [shape: f32[32,16], index: 1, kind: input, shape index: {}]
  %s2 = inlined_call_operand.hbm [shape: f32[2,32,256], index: 2, kind: output, shape index: {}]
  %s3 = sld [smem:[#allocation0]]
  $region45: #{tpu_custom_call.1} parent=0
    _
  %s5 = ssub.s32 1, %s3
  %s6 = scalar_select 0, %s5, %s3
  $region1: #{tpu_custom_call.1} parent=0
    #allocation2 [shape = 'u8[32768]{0}', space=vmem, size = 0x8000, scoped, tag = 'input window, operand 0']
    #allocation3 [shape = 's32[2]{0}', space=sflag, size = 0x8, scoped, tag = 'scoped memory for tpu_custom_call.1']
    #allocation4 [shape = 's32[2]{0}', space=sflag, size = 0x8, scoped, tag = 'scoped memory for tpu_custom_call.1']
    #allocation5 [shape = 'u8[65536]{0}', space=vmem, size = 0x10000, scoped, tag = 'output window, operand 0']
    %7 = vsyncpa [#allocation3], 0
    %s8 = scalar_lea.sflag [#allocation3], 1
    %9 = vsyncpa %s8, 0
    %10 = vsyncpa [#allocation4], 0
    %s11 = scalar_lea.sflag [#allocation4], 1
    %12 = vsyncpa %s11, 0
    loop: start=0, step=1, limit=4
    $region2: #{tpu_custom_call.1} parent=1 // loop_pre_header
      _
    $region3: #{tpu_custom_call.1} parent=1 // loop_header
      %s14 = sphi 0, %s18
      %p15 = scmp.ge.s32.totalorder %s14, 4
      %s21 = sphi 0, %s33
      %s22 = sphi 0, %s29
      %s23 = sphi 0, %s21
      %s24 = sphi 0, %s22
      %s25 = sphi 0, %s23
      %s26 = sphi 0, %s24
      %s38 = sphi 0, %s40
      %s41 = sphi 0, %s38
      %s42 = sphi 0, %s41
      %s58 = sphi 0, %s42
      %s62 = sphi 0, %s62
      %s64 = sphi 0, %s62
      %s65 = sphi 0, %s64
      %s79 = sphi 0, %s65
      %s87 = sphi 0, %s89
      %s90 = sphi 0, %s87
      %s91 = sphi 0, %s90
      %s107 = sphi 0, %s91
    $region4: #{tpu_custom_call.1} parent=1 // loop_header_branch
      %17 = sbr.rel (%p15) target = $region8
    $region5: #{tpu_custom_call.1} parent=1 // loop_body
      %s19 = ssub.s32 %s14, 1
      %s20 = ssub.s32 %s14, 2
      %s27 = sadd.s32 1, %s22
      %p28 = scmp.ge.s32.totalorder %s27, 1
      %s29 = scalar_select %p28, 0, %s27
      %s30 = sadd.s32 1, %s21
      %s31 = scalar_select %p28, %s30, %s21
      %p32 = scmp.ge.s32.totalorder %s31, 2
      %s33 = scalar_select %p32, 0, %s31
      %s34 = ssub.s32 %s21, %s33
      %s35 = ssub.s32 %s22, %s29
      %s36 = sor.u32 %s34, %s35
      %p37 = scmp.eq.s32.totalorder %s36, 0
      %s39 = sadd.s32 %s38, 1
      %s40 = scalar_select %p37, %s38, %s39
      %p43 = pneg %p37
      %p44 = scmp.eq.s32.totalorder %s14, 1
      %p45 = por %p43, %p44
      %p46 = scmp.ne.s32.totalorder %s38, %s41
      %p47 = scmp.eq.s32.totalorder %s14, 0
      %p48 = por %p46, %p47
      %p49 = scmp.ne.s32.totalorder %s38, %s41
      %p50 = scmp.eq.s32.totalorder %s19, 1
      %p51 = por %p49, %p50
      %p52 = scmp.ne.s32.totalorder %s41, %s42
      %p53 = scmp.eq.s32.totalorder %s19, 0
      %p54 = por %p52, %p53
      %p55 = scmp.ne.s32.totalorder %s41, %s42
      %p56 = scmp.eq.s32.totalorder %s20, 1
      %p57 = por %p55, %p56
      %p59 = scmp.ne.s32.totalorder %s42, %s58
      %p60 = scmp.eq.s32.totalorder %s20, 0
      %p61 = por %p59, %p60
      %s63 = sadd.s32 %s62, 1
      %p66 = scmp.eq.s32.totalorder %s14, 1
      %p67 = scmp.ne.s32.totalorder %s62, %s64
      %p68 = scmp.eq.s32.totalorder %s14, 0
      %p69 = por %p67, %p68
      %p70 = scmp.ne.s32.totalorder %s62, %s64
      %p71 = scmp.eq.s32.totalorder %s19, 1
      %p72 = por %p70, %p71
      %p73 = scmp.ne.s32.totalorder %s64, %s65
      %p74 = scmp.eq.s32.totalorder %s19, 0
      %p75 = por %p73, %p74
      %p76 = scmp.ne.s32.totalorder %s64, %s65
      %p77 = scmp.eq.s32.totalorder %s20, 1
      %p78 = por %p76, %p77
      %p80 = scmp.ne.s32.totalorder %s65, %s79
      %p81 = scmp.eq.s32.totalorder %s20, 0
      %p82 = por %p80, %p81
      %s83 = ssub.s32 %s21, %s33
      %s84 = ssub.s32 %s22, %s29
      %s85 = sor.u32 %s83, %s84
      %p86 = scmp.eq.s32.totalorder %s85, 0
      %s88 = sadd.s32 %s87, 1
      %s89 = scalar_select %p86, %s87, %s88
      %p92 = pneg %p86
      %p93 = scmp.eq.s32.totalorder %s14, 1
      %p94 = por %p92, %p93
      %p95 = scmp.ne.s32.totalorder %s87, %s90
      %p96 = scmp.eq.s32.totalorder %s14, 0
      %p97 = por %p95, %p96
      %p98 = scmp.ne.s32.totalorder %s87, %s90
      %p99 = scmp.eq.s32.totalorder %s19, 1
      %p100 = por %p98, %p99
      %p101 = scmp.ne.s32.totalorder %s90, %s91
      %p102 = scmp.eq.s32.totalorder %s19, 0
      %p103 = por %p101, %p102
      %p104 = scmp.ne.s32.totalorder %s90, %s91
      %p105 = scmp.eq.s32.totalorder %s20, 1
      %p106 = por %p104, %p105
      %p108 = scmp.ne.s32.totalorder %s91, %s107
      %p109 = scmp.eq.s32.totalorder %s20, 0
      %p110 = por %p108, %p109
      %p111 = scmp.le.s32.totalorder 1, %s14
      %p112 = scmp.lt.s32.totalorder %s14, 3
      %p113 = pnand %p111, %p112
      %p114 = pneg %p113
      // Predicated region
      $region9: #{tpu_custom_call.1} parent=5 // pred_check
        _
      $region10: #{tpu_custom_call.1} parent=5 // pred_check_branch
        %116 = sbr.rel (%p113) target = $region12
      $region11: #{tpu_custom_call.1} parent=5 // pred_region
        %s117 = ssub.s32 %s14, 1
        // Predicated region
        $region13: #{tpu_custom_call.1} parent=11 // pred_check
          %p118 = pneg %p75
        $region14: #{tpu_custom_call.1} parent=11 // pred_check_branch
          %120 = sbr.rel (%p118) target = $region16
        $region15: #{tpu_custom_call.1} parent=11 // pred_region
          _
        $region16: #{tpu_custom_call.1} parent=11 // pred_fallthru
          _
      $region12: #{tpu_custom_call.1} parent=5 // pred_fallthru
        _
      %p121 = scmp.lt.s32.totalorder %s14, 2
      // Predicated region
      $region17: #{tpu_custom_call.1} parent=5 // pred_check
        %p122 = pneg %p121
      $region18: #{tpu_custom_call.1} parent=5 // pred_check_branch
        %124 = sbr.rel (%p122) target = $region20
      $region19: #{tpu_custom_call.1} parent=5 // pred_region
        // Predicated region
        $region21: #{tpu_custom_call.1} parent=19 // pred_check
          %p125 = pneg %p48
        $region22: #{tpu_custom_call.1} parent=19 // pred_check_branch
          %127 = sbr.rel (%p125) target = $region24
        $region23: #{tpu_custom_call.1} parent=19 // pred_region
          %s128 = sand.u32 %s38, 1
          %s129 = scalar_lea.sflag [#allocation3], %s128
          %s130 = sand.u32 %s38, 1
          %s131 = smul.addr %s130, 32
          %s132 = scalar_lea.vmem [#allocation2], %s131
          %s133 = smul.u32 2, %s22
          %s135 = ssub.s32 512, 512
          %136 = vsyncadd %s129, %s135
          %s137 = smul.addr %s21, 4
          %s138 = sadd.s32 %s133, %s137
          %s139 = smul.addr %s138, 128
          %s140 = scalar_lea.hbm %s0, %s139
          %s141 = sshll.u32 %s132, 4
          %s142 = int_to_ptr.vmem [resolvable:$true] %s141
          %147 = dma.hbm_to_vmem [thread:$0]  %s140, 512, %s142, %s129, 256, 256, 16
        $region24: #{tpu_custom_call.1} parent=19 // pred_fallthru
          _
      $region20: #{tpu_custom_call.1} parent=5 // pred_fallthru
        _
      %p148 = scmp.le.s32.totalorder 1, %s14
      %p149 = scmp.lt.s32.totalorder %s14, 3
      %p150 = pnand %p148, %p149
      %p151 = pneg %p150
      // Predicated region
      $region25: #{tpu_custom_call.1} parent=5 // pred_check
        _
      $region26: #{tpu_custom_call.1} parent=5 // pred_check_branch
        %153 = sbr.rel (%p150) target = $region28
      $region27: #{tpu_custom_call.1} parent=5 // pred_region
        %s154 = ssub.s32 %s14, 1
        %s155 = sand.u32 %s41, 1
        %s156 = scalar_lea.sflag [#allocation3], %s155
        %s157 = sand.u32 %s41, 1
        %s158 = smul.addr %s157, 32
        %s159 = scalar_lea.vmem [#allocation2], %s158
        // Predicated region
        $region29: #{tpu_custom_call.1} parent=27 // pred_check
          %p160 = pneg %p54
        $region30: #{tpu_custom_call.1} parent=27 // pred_check_branch
          %162 = sbr.rel (%p160) target = $region32
        $region31: #{tpu_custom_call.1} parent=27 // pred_region
          %163 = dma.done %s156, 512
        $region32: #{tpu_custom_call.1} parent=27 // pred_fallthru
          _
        %s164 = sand.u32 %s41, 1
        %s165 = scalar_lea.sflag [#allocation3], %s164
        %s166 = sand.u32 %s41, 1
        %s167 = smul.addr %s166, 32
        %s168 = scalar_lea.vmem [#allocation2], %s167
        %p169 = pneg %p54
        %p170 = pneg %p51
        %p171 = pneg %p75
        %p172 = pneg %p72
        %p173 = pneg %p103
        %p174 = pneg %p100
        %s175 = sand.u32 %s90, 1
        %s176 = scalar_lea.sflag [#allocation4], %s175
        %s177 = sand.u32 %s90, 1
        %s178 = smul.addr %s177, 64
        %s179 = scalar_lea.vmem [#allocation5], %s178
        %s180 = smul.u32 2, %s24
        %s181 = smul.u32 2, %s24
        %v182 = vld [vmem:[%s159] sm:$0xff]
        %v183 = vld [vmem:[%s159 + $0x8] sm:$0xff]
        %v184 = vld [vmem:[%s159 + $0x10] sm:$0xff]
        %v185 = vld [vmem:[%s159 + $0x18] sm:$0xff]
        %v186 = vld [vmem:[%s1] sm:$0xff]
        %v187 = vld [vmem:[%s1 + $0x8] sm:$0xff]
        %v188 = vld [vmem:[%s1 + $0x10] sm:$0xff]
        %v189 = vld [vmem:[%s1 + $0x18] sm:$0xff]
        %vm190 = vcmask 130048
        %v192 = vsel %vm190, %v186, 0
        %v195 = vsel %vm190, %v187, 0
        %v198 = vsel %vm190, %v188, 0
        %v201 = vsel %vm190, %v189, 0
        %203 = vmatprep.subr.mxu0 %v183
        %204 = vmatpush1.msra.mxu0 %v182
        %205 = vmatprep.subr.mxu0 %v185
        %206 = vmatpush1.msra.mxu0 %v184
        %207 = vmatprep.subr.mxu0 0.0
        %208 = vmatpush1.msra.mxu0 0.0
        %209 = vmatprep.subr.mxu0 0.0
        %210 = vmatpush1.msra.mxu0 0.0
        %211 = vmatprep.subr.mxu0 0.0
        %212 = vmatpush1.msra.mxu0 0.0
        %213 = vmatprep.subr.mxu0 0.0
        %214 = vmatpush1.msra.mxu0 0.0
        %215 = vmatprep.subr.mxu0 0.0
        %216 = vmatpush1.msra.mxu0 0.0
        %217 = vmatprep.subr.mxu0 0.0
        %218 = vmatpush1.msra.mxu0 0.0
        %219 = vmatprep.subr.mxu0 0.0
        %220 = vmatpush1.msra.mxu0 0.0
        %221 = vmatprep.subr.mxu0 0.0
        %222 = vmatpush1.msra.mxu0 0.0
        %223 = vmatprep.subr.mxu0 0.0
        %224 = vmatpush1.msra.mxu0 0.0
        %225 = vmatprep.subr.mxu0 0.0
        %226 = vmatpush1.msra.mxu0 0.0
        %227 = vmatprep.subr.mxu0 0.0
        %228 = vmatpush1.msra.mxu0 0.0
        %229 = vmatprep.subr.mxu0 0.0
        %230 = vmatpush1.msra.mxu0 0.0
        %231 = vmatprep.subr.mxu0 0.0
        %232 = vmatpush1.msra.mxu0 0.0
        %233 = vmatprep.subr.mxu0 0.0
        %234 = vmatpush1.msra.mxu0 0.0
        %235 = vmatprep.subr.mxu0 0.0
        %236 = vmatpush1.msra.mxu0 0.0
        %237 = vmatprep.subr.mxu0 0.0
        %238 = vmatpush1.msra.mxu0 0.0
        %239 = vmatprep.subr.mxu0 0.0
        %240 = vmatpush1.msra.mxu0 0.0
        %241 = vmatprep.subr.mxu0 0.0
        %242 = vmatpush1.msra.mxu0 0.0
        %243 = vmatprep.subr.mxu0 0.0
        %244 = vmatpush1.msra.mxu0 0.0
        %245 = vmatprep.subr.mxu0 0.0
        %246 = vmatpush1.msra.mxu0 0.0
        %247 = vmatprep.subr.mxu0 0.0
        %248 = vmatpush1.msra.mxu0 0.0
        %249 = vmatprep.subr.mxu0 0.0
        %250 = vmatpush1.msra.mxu0 0.0
        %251 = vmatprep.subr.mxu0 0.0
        %252 = vmatpush1.msra.mxu0 0.0
        %253 = vmatprep.subr.mxu0 0.0
        %254 = vmatpush1.msra.mxu0 0.0
        %255 = vmatprep.subr.mxu0 0.0
        %256 = vmatpush1.msra.mxu0 0.0
        %257 = vmatprep.subr.mxu0 0.0
        %258 = vmatpush1.msra.mxu0 0.0
        %259 = vmatprep.subr.mxu0 0.0
        %260 = vmatpush1.msra.mxu0 0.0
        %261 = vmatprep.subr.mxu0 0.0
        %262 = vmatpush1.msra.mxu0 0.0
        %263 = vmatprep.subr.mxu0 0.0
        %264 = vmatpush1.msra.mxu0 0.0
        %265 = vmatprep.subr.mxu0 0.0
        %266 = vmatpush1.msra.mxu0 0.0
        %267 = vmatprep.mubr.f32.mxu0 0.0
        %268 = vmatmul.mubr.f32.gmra.mrb[0].mxu0 %v192
        %v269 = vpop.f32.mrb[0].mxu0
        %v270 = vadd.f32 0.0, %v269
        %v271 = vpop.f32.mrb[0].mxu0
        %v272 = vadd.f32 0.0, %v271
        %273 = vmatprep.mubr.f32.mxu0 0.0
        %274 = vmatmul.mubr.f32.gmra.mrb[0].mxu0 %v195
        %v275 = vpop.f32.mrb[0].mxu0
        %v276 = vadd.f32 0.0, %v275
        %v277 = vpop.f32.mrb[0].mxu0
        %v278 = vadd.f32 0.0, %v277
        %279 = vmatprep.mubr.f32.mxu0 0.0
        %280 = vmatmul.mubr.f32.gmra.mrb[0].mxu0 %v198
        %v281 = vpop.f32.mrb[0].mxu0
        %v282 = vadd.f32 0.0, %v281
        %v283 = vpop.f32.mrb[0].mxu0
        %v284 = vadd.f32 0.0, %v283
        %285 = vmatprep.mubr.f32.mxu0 0.0
        %286 = vmatmul.mubr.f32.gmra.mrb[0].mxu0 %v201
        %v287 = vpop.f32.mrb[0].mxu0
        %v288 = vadd.f32 0.0, %v287
        %v289 = vpop.f32.mrb[0].mxu0
        %v290 = vadd.f32 0.0, %v289
        %291 = vdwg.mxu0
        %292 = vst [vmem:[%s179] sm:$0xff] %v270
        %293 = vst [vmem:[%s179 + $0x8] sm:$0xff] %v272
        %294 = vst [vmem:[%s179 + $0x10] sm:$0xff] %v276
        %295 = vst [vmem:[%s179 + $0x18] sm:$0xff] %v278
        %296 = vst [vmem:[%s179 + $0x20] sm:$0xff] %v282
        %297 = vst [vmem:[%s179 + $0x28] sm:$0xff] %v284
        %298 = vst [vmem:[%s179 + $0x30] sm:$0xff] %v288
        %299 = vst [vmem:[%s179 + $0x38] sm:$0xff] %v290
        %s300 = sand.u32 %s90, 1
        %s301 = scalar_lea.sflag [#allocation4], %s300
        %s302 = sand.u32 %s90, 1
        %s303 = smul.addr %s302, 64
        %s304 = scalar_lea.vmem [#allocation5], %s303
        // Predicated region
        $region33: #{tpu_custom_call.1} parent=27 // pred_check
          %p305 = pneg %p100
        $region34: #{tpu_custom_call.1} parent=27 // pred_check_branch
          %307 = sbr.rel (%p305) target = $region36
        $region35: #{tpu_custom_call.1} parent=27 // pred_region
          %s308 = smul.u32 2, %s24
          %s310 = ssub.s32 1024, 1024
          %311 = vsyncadd %s301, %s310
          %s312 = smul.addr %s23, 8
          %s313 = sadd.s32 %s308, %s312
          %s314 = smul.addr %s313, 128
          %s315 = scalar_lea.hbm %s2, %s314
          %s316 = sshll.u32 %s304, 4
          %s317 = int_to_ptr.vmem [resolvable:$true] %s316
          %322 = dma.vmem_to_hbm [thread:$0]  %s317, 1024, %s315, %s301, 256, 256, 16
        $region36: #{tpu_custom_call.1} parent=27 // pred_fallthru
          _
      $region28: #{tpu_custom_call.1} parent=5 // pred_fallthru
        _
      %p323 = scmp.le.s32.totalorder 2, %s14
      // Predicated region
      $region37: #{tpu_custom_call.1} parent=5 // pred_check
        %p324 = pneg %p323
      $region38: #{tpu_custom_call.1} parent=5 // pred_check_branch
        %326 = sbr.rel (%p324) target = $region40
      $region39: #{tpu_custom_call.1} parent=5 // pred_region
        %s327 = ssub.s32 %s14, 2
        // Predicated region
        $region41: #{tpu_custom_call.1} parent=39 // pred_check
          %p328 = pneg %p106
        $region42: #{tpu_custom_call.1} parent=39 // pred_check_branch
          %330 = sbr.rel (%p328) target = $region44
        $region43: #{tpu_custom_call.1} parent=39 // pred_region
          %s331 = sand.u32 %s91, 1
          %s332 = scalar_lea.sflag [#allocation4], %s331
          %s333 = sand.u32 %s91, 1
          %s334 = smul.addr %s333, 64
          %s335 = scalar_lea.vmem [#allocation5], %s334
          %336 = dma.done %s332, 1024
        $region44: #{tpu_custom_call.1} parent=39 // pred_fallthru
          _
      $region40: #{tpu_custom_call.1} parent=5 // pred_fallthru
        _
    $region6: #{tpu_custom_call.1} parent=1 // loop_footer
      %s18 = sadd.s32 1, %s14
    $region7: #{tpu_custom_call.1} parent=1 // loop_footer_branch
      %13 = sbr.rel target = $region3
    $region8: #{tpu_custom_call.1} parent=1 // loop_exit
      _
    %337 = vsyncpa [#allocation3], 1
    %s338 = scalar_lea.sflag [#allocation3], 1
    %339 = vsyncpa %s338, 1
    %340 = vsyncpa [#allocation4], 1
    %s341 = scalar_lea.sflag [#allocation4], 1
    %342 = vsyncpa %s341, 1

</llo_original>
